<compile_context>
chip_gen: v6e
topology: v6e:2x2x1
jax: 0.10.0
libtpu: 0.0.40
codegen_flags: <defaults>
</compile_context>

<pallas_src>
import jax
import jax.numpy as jnp
from jax.experimental import pallas as pl
from jax.experimental.pallas import tpu as pltpu


def _round_up(x, m):
    return (x + m - 1) // m * m


def _pick_ts(rows, tile_rows):
    """Pick the pixel-row tile size.

    Returns (TS, rows_p).  TS is sublane-aligned (multiple of 8; multiple of 32
    whenever the array is split into more than one block, which keeps int8
    target tiles on their native (32,128) layout).  Prefers a TS that divides
    `rows` exactly so the wrapper can skip the jnp.pad HBM copy entirely.
    """
    tile_rows = max(32, tile_rows - (tile_rows % 32))
    if rows <= tile_rows:
        ts = _round_up(rows, 8)            # single full-extent tile
        return ts, ts
    for t in range(tile_rows, 31, -32):    # exact divisor -> no padding
        if rows % t == 0:
            return t, rows
    return tile_rows, _round_up(rows, tile_rows)


def _make_kernel(ts, n_valid, n_padded, ns, nk_per):
    masked = n_padded != n_valid           # trace-time constant
    groups = ts // 8
    nk_total = ns * nk_per

    def kernel(logits_ref, target_ref, out_ref):
        s = pl.program_id(1)
        k = pl.program_id(2)

        @pl.when(k == 0)
        def _init():
            out_ref[...] = jnp.zeros_like(out_ref)

        # Per-tile in-kernel cast to f32 (inputs may be bf16 / int8 / bool).
        lg0 = logits_ref[0, 0].astype(jnp.float32)     # (TS,128) class-0 logits
        lg1 = logits_ref[0, 1].astype(jnp.float32)     # (TS,128) class-1 logits
        t1 = target_ref[0, 0].astype(jnp.float32)      # (TS,128) target in {0,1}

        # C==2 sigmoid/softplus form: 1 exp + 1 log + 1 approx reciprocal / pixel.
        z = lg1 - lg0
        e = jnp.exp(-jnp.abs(z))
        # Dice path: approximate EUP reciprocal is plenty for dice statistics.
        p1 = jnp.where(z >= 0, 1.0, e) * pl.reciprocal(1.0 + e, approx=True)
        # CE path: exact log (stable softplus).  jnp.log(1+e) instead of log1p to
        # stay on guaranteed Mosaic lowerings; e in (0,1] so the absolute error is
        # ~1e-7 per pixel, irrelevant for the mean loss.
        u = z * (1.0 - 2.0 * t1)           # t1 in {0,1} -> sign flip only
        ce_pix = jnp.maximum(u, 0.0) + jnp.log(1.0 + e)

        def fold(x):
            # (TS,128) -> (8,128): plain vreg adds over the leading groups axis
            # (no XLU lane/sublane reduction in the hot loop).
            return jnp.sum(x.reshape(groups, 8, 128), axis=0)

        def accumulate(mask_fn):
            out_ref[0, 0, 0] += fold(mask_fn(ce_pix))    # per-block CE sum
            out_ref[0, 0, 1] += fold(mask_fn(p1 * t1))   # class-1 intersection
            out_ref[0, 0, 2] += fold(mask_fn(p1))        # class-1 probability sum
            out_ref[0, 0, 3] += fold(mask_fn(t1))        # class-1 target sum

        if masked:
            # All padded pixels live in the very last pixel tile; keep the mask
            # work (two iotas, compare, selects) out of the hot loop.
            is_tail = (s == ns - 1) & (k == nk_per - 1)

            @pl.when(is_tail)
            def _tail():
                row = jax.lax.broadcasted_iota(jnp.int32, (ts, 128), 0)
                col = jax.lax.broadcasted_iota(jnp.int32, (ts, 128), 1)
                pix = ((nk_total - 1) * ts + row) * 128 + col
                valid = pix < n_valid
                accumulate(lambda x: jnp.where(valid, x, 0.0))

            @pl.when(jnp.logical_not(is_tail))
            def _body():
                accumulate(lambda x: x)
        else:
            accumulate(lambda x: x)

    return kernel


def dc_and_ce_loss(logits, target, smooth=1.0, tile_rows=1024):
    """CrossEntropyLoss(mean) + SoftDiceLoss(smooth) for 2-class segmentation.

    logits: [B, 2, H, W]; pass bf16 to halve HBM traffic (the kernel casts per tile).
    target: [B, 1, H, W] with values in {0, 1}; bool / int8 recommended.
    """
    # TODO(synk): no ignore_index / label-smoothing handling (plain nn.CrossEntropyLoss only).
    B, C, H, W = logits.shape
    assert C == 2 and target.shape == (B, 1, H, W)
    N = H * W

    rows = pl.cdiv(N, 128)
    TS, rows_p = _pick_ts(rows, tile_rows)
    n_padded = rows_p * 128
    nk = rows_p // TS

    # Megacore split of the pixel axis so B == 1 still uses both v7x TensorCores.
    ns = 2 if (B == 1 and nk >= 2 and nk % 2 == 0) else 1
    nk_per = nk // ns

    # Lane-dense re-layout: [B,C,H,W] -> [B,C,rows_p,128] (pixels on the lane axis).
    lg = logits.reshape(B, C, N)
    tg = target.reshape(B, 1, N)
    if tg.dtype == jnp.bool_:
        tg = tg.astype(jnp.int8)
    if n_padded != N:       # fallback only; common shapes take the pad-free path
        pad = ((0, 0), (0, 0), (0, n_padded - N))
        lg = jnp.pad(lg, pad)
        tg = jnp.pad(tg, pad)
    lg = lg.reshape(B, C, rows_p, 128)
    tg = tg.reshape(B, 1, rows_p, 128)

    kernel = _make_kernel(TS, N, n_padded, ns, nk_per)

    # Per-(batch, split) stats: [ce_sum, inter1, psum1, tsum1] as (8,128) f32 slabs.
    # If a v5e profile shows exposed DMA, add pipeline_mode=pl.Buffered(3) to the
    # logits BlockSpec; default double-buffering is enough on v6e/v7x.
    stats = pl.pallas_call(
        kernel,
        out_shape=jax.ShapeDtypeStruct((B, ns, 4, 8, 128), jnp.float32),
        grid_spec=pltpu.PrefetchScalarGridSpec(
            num_scalar_prefetch=0,
            grid=(B, ns, nk_per),
            in_specs=[
                pl.BlockSpec((1, C, TS, 128),
                             lambda b, s, k: (b, 0, s * nk_per + k, 0)),
                pl.BlockSpec((1, 1, TS, 128),
                             lambda b, s, k: (b, 0, s * nk_per + k, 0)),
            ],
            out_specs=pl.BlockSpec((1, 1, 4, 8, 128),
                                   lambda b, s, k: (b, s, 0, 0, 0)),
        ),
        compiler_params=pltpu.CompilerParams(
            dimension_semantics=("parallel", "parallel", "arbitrary"),
            vmem_limit_bytes=32 * 1024 * 1024),
    )(lg, tg)

    sums = jnp.sum(stats, axis=(1, 3, 4))              # (B, 4)
    ce_sum = sums[:, 0]
    inter1 = sums[:, 1]
    psum1 = sums[:, 2]
    tsum1 = sums[:, 3]

    # Class-0 statistics via the C==2 algebra (N = true pixel count per batch elem).
    npix = jnp.float32(N)
    inter0 = npix - psum1 - tsum1 + inter1
    psum0 = npix - psum1
    tsum0 = npix - tsum1

    # CrossEntropyLoss(reduction='mean') over all B*H*W pixels.
    ce_loss = jnp.sum(ce_sum) / (B * N)
    # SoftDiceLoss: mean over the (B, 2) dice scores.
    dice1 = (2.0 * inter1 + smooth) / (psum1 + tsum1 + smooth)
    dice0 = (2.0 * inter0 + smooth) / (psum0 + tsum0 + smooth)
    dice_loss = 1.0 - 0.5 * jnp.mean(dice0 + dice1)
    return ce_loss + dice_loss


def _reference_loss(logits, target, smooth=1.0):
    # Pure-JAX reference matching the PyTorch module (CE + SoftDice).
    probs = jax.nn.softmax(logits, axis=1)
    tgt = jnp.concatenate([1.0 - target, target], axis=1)
    B = logits.shape[0]
    pf = probs.reshape(B, 2, -1)
    tf = tgt.reshape(B, 2, -1)
    inter = jnp.sum(pf * tf, axis=-1)
    card = jnp.sum(pf, axis=-1) + jnp.sum(tf, axis=-1)
    dice_loss = 1.0 - jnp.mean((2.0 * inter + smooth) / (card + smooth))
    logp = jax.nn.log_softmax(logits, axis=1)
    ce_loss = -jnp.mean(jnp.sum(tgt * logp, axis=1))
    return ce_loss + dice_loss


if __name__ == "__main__":
    key = jax.random.PRNGKey(0)

    def check(B, H, W, dtype, tile_rows, tol):
        k1, k2 = jax.random.split(jax.random.fold_in(key, H * W + B))
        logits = jax.random.normal(k1, (B, 2, H, W), dtype=jnp.float32)
        target = jax.random.bernoulli(k2, 0.3, (B, 1, H, W))
        out = dc_and_ce_loss(logits.astype(dtype), target.astype(jnp.int8),
                             tile_rows=tile_rows)
        out = jax.block_until_ready(out)
        ref = _reference_loss(logits.astype(dtype).astype(jnp.float32),
                              target.astype(jnp.float32))
        assert jnp.allclose(out, ref, atol=tol, rtol=tol), (B, H, W, float(out), float(ref))

    # Exact-fit path: no padding, single full-extent pixel tile per batch element.
    check(2, 32, 32, jnp.float32, 1024, 2e-3)
    # Multi-tile accumulation + B==1 megacore pixel split (ns == 2), pad-free divisor path.
    check(1, 128, 128, jnp.float32, 32, 2e-3)
    # Padded / pl.when-gated masked-tail path with bf16 logits (caller-contract dtype).
    check(2, 19, 23, jnp.bfloat16, 1024, 5e-3)

    print("KERNEL_OK")
</pallas_src>

<mosaic_0001>
module attributes {stable_mosaic.version = 11 : i64} {
  func.func @kernel(%arg0: i32, %arg1: i32, %arg2: i32, %arg3: memref<1x2x8x128xf32, #tpu.memory_space<vmem>>, %arg4: memref<1x1x8x128xi8, #tpu.memory_space<vmem>>, %arg5: memref<1x1x4x8x128xf32, #tpu.memory_space<vmem>>) attributes {dimension_semantics = [#tpu.dimension_semantics<parallel>, #tpu.dimension_semantics<parallel>, #tpu.dimension_semantics<arbitrary>], iteration_bounds = array<i64: 2, 1, 1>, scalar_prefetch = 0 : i64, scratch_operands = 0 : i64, tpu.core_type = #tpu.core_type<tc>, window_params = [{transform_indices = @transform_0, window_bounds = array<i64: 1, 2, 8, 128>}, {transform_indices = @transform_1, window_bounds = array<i64: 1, 1, 8, 128>}, {transform_indices = @transform_2, window_bounds = array<i64: 1, 1, 4, 8, 128>}]} {
    %c0_i32 = arith.constant 0 : i32
    %0 = arith.cmpi eq, %arg2, %c0_i32 : i32
    %1 = arith.extui %0 : i1 to i32
    %c0_i32_0 = arith.constant 0 : i32
    %2 = arith.cmpi ne, %1, %c0_i32_0 : i32
    scf.if %2 {
      %cst_60 = arith.constant 0.000000e+00 : f32
      %67 = vector.broadcast %cst_60 : f32 to vector<1x1x4x8x128xf32>
      %c0_61 = arith.constant 0 : index
      %c0_62 = arith.constant 0 : index
      %c0_63 = arith.constant 0 : index
      %c0_64 = arith.constant 0 : index
      %c0_65 = arith.constant 0 : index
      %68 = vector.load %arg5[%c0_61, %c0_62, %c0_63, %c0_64, %c0_65] : memref<1x1x4x8x128xf32, #tpu.memory_space<vmem>>, vector<1x1x4x8x128xf32>
      tpu.vector_store %arg5[%c0_61, %c0_62, %c0_63, %c0_64, %c0_65], %67 {strides = array<i32>} : memref<1x1x4x8x128xf32, #tpu.memory_space<vmem>>, vector<1x1x4x8x128xf32>,
    } else {
    }
    %c0 = arith.constant 0 : index
    %c0_1 = arith.constant 0 : index
    %c0_2 = arith.constant 0 : index
    %c0_3 = arith.constant 0 : index
    %3 = vector.load %arg3[%c0, %c0_1, %c0_2, %c0_3] : memref<1x2x8x128xf32, #tpu.memory_space<vmem>>, vector<1x1x8x128xf32>
    %4 = vector.shape_cast %3 : vector<1x1x8x128xf32> to vector<8x128xf32>
    %c0_4 = arith.constant 0 : index
    %c1 = arith.constant 1 : index
    %c0_5 = arith.constant 0 : index
    %c0_6 = arith.constant 0 : index
    %5 = vector.load %arg3[%c0_4, %c1, %c0_5, %c0_6] : memref<1x2x8x128xf32, #tpu.memory_space<vmem>>, vector<1x1x8x128xf32>
    %6 = vector.shape_cast %5 : vector<1x1x8x128xf32> to vector<8x128xf32>
    %c0_7 = arith.constant 0 : index
    %c0_8 = arith.constant 0 : index
    %c0_9 = arith.constant 0 : index
    %c0_10 = arith.constant 0 : index
    %7 = vector.load %arg4[%c0_7, %c0_8, %c0_9, %c0_10] : memref<1x1x8x128xi8, #tpu.memory_space<vmem>>, vector<1x1x8x128xi8>
    %8 = vector.shape_cast %7 : vector<1x1x8x128xi8> to vector<8x128xi8>
    %9 = arith.sitofp %8 : vector<8x128xi8> to vector<8x128xf32>
    %10 = arith.subf %6, %4 : vector<8x128xf32>
    %11 = math.absf %10 : vector<8x128xf32>
    %cst = arith.constant 0.000000e+00 : f32
    %12 = vector.broadcast %cst : f32 to vector<8x128xf32>
    %13 = arith.subf %12, %11 : vector<8x128xf32>
    %14 = math.exp %13 : vector<8x128xf32>
    %cst_11 = arith.constant 0.000000e+00 : f32
    %15 = vector.broadcast %cst_11 : f32 to vector<8x128xf32>
    %16 = arith.cmpf oge, %10, %15 : vector<8x128xf32>
    %cst_12 = arith.constant 1.000000e+00 : f32
    %17 = vector.broadcast %cst_12 : f32 to vector<8x128xf32>
    %18 = arith.select %16, %17, %14 : vector<8x128xi1>, vector<8x128xf32>
    %cst_13 = arith.constant 1.000000e+00 : f32
    %19 = vector.broadcast %cst_13 : f32 to vector<8x128xf32>
    %20 = arith.addf %19, %14 : vector<8x128xf32>
    %21 = tpu.reciprocal %20 {approx = true} : vector<8x128xf32> -> vector<8x128xf32>
    %22 = arith.mulf %18, %21 : vector<8x128xf32>
    %cst_14 = arith.constant 2.000000e+00 : f32
    %23 = vector.broadcast %cst_14 : f32 to vector<8x128xf32>
    %24 = arith.mulf %23, %9 : vector<8x128xf32>
    %cst_15 = arith.constant 1.000000e+00 : f32
    %25 = vector.broadcast %cst_15 : f32 to vector<8x128xf32>
    %26 = arith.subf %25, %24 : vector<8x128xf32>
    %27 = arith.mulf %10, %26 : vector<8x128xf32>
    %cst_16 = arith.constant 0.000000e+00 : f32
    %28 = vector.broadcast %cst_16 : f32 to vector<8x128xf32>
    %29 = arith.maximumf %27, %28 : vector<8x128xf32>
    %cst_17 = arith.constant 1.000000e+00 : f32
    %30 = vector.broadcast %cst_17 : f32 to vector<8x128xf32>
    %31 = arith.addf %30, %14 : vector<8x128xf32>
    %32 = math.log %31 : vector<8x128xf32>
    %33 = arith.addf %29, %32 : vector<8x128xf32>
    %c0_18 = arith.constant 0 : index
    %c0_19 = arith.constant 0 : index
    %c0_20 = arith.constant 0 : index
    %c0_21 = arith.constant 0 : index
    %c0_22 = arith.constant 0 : index
    %34 = vector.load %arg5[%c0_18, %c0_19, %c0_20, %c0_21, %c0_22] : memref<1x1x4x8x128xf32, #tpu.memory_space<vmem>>, vector<1x1x1x8x128xf32>
    %35 = vector.shape_cast %34 : vector<1x1x1x8x128xf32> to vector<8x128xf32>
    %36 = vector.shape_cast %33 : vector<8x128xf32> to vector<1x8x128xf32>
    %cst_23 = arith.constant dense<0.000000e+00> : vector<8x128xf32>
    %37 = vector.multi_reduction <add>, %36, %cst_23 [0] : vector<1x8x128xf32> to vector<8x128xf32>
    %38 = arith.addf %35, %37 : vector<8x128xf32>
    %c0_24 = arith.constant 0 : index
    %c0_25 = arith.constant 0 : index
    %c0_26 = arith.constant 0 : index
    %c0_27 = arith.constant 0 : index
    %c0_28 = arith.constant 0 : index
    %39 = vector.load %arg5[%c0_24, %c0_25, %c0_26, %c0_27, %c0_28] : memref<1x1x4x8x128xf32, #tpu.memory_space<vmem>>, vector<1x1x1x8x128xf32>
    %40 = vector.shape_cast %39 : vector<1x1x1x8x128xf32> to vector<8x128xf32>
    %41 = vector.shape_cast %38 : vector<8x128xf32> to vector<1x1x1x8x128xf32>
    tpu.vector_store %arg5[%c0_24, %c0_25, %c0_26, %c0_27, %c0_28], %41 {strides = array<i32>} : memref<1x1x4x8x128xf32, #tpu.memory_space<vmem>>, vector<1x1x1x8x128xf32>,
    %c0_29 = arith.constant 0 : index
    %c0_30 = arith.constant 0 : index
    %c1_31 = arith.constant 1 : index
    %c0_32 = arith.constant 0 : index
    %c0_33 = arith.constant 0 : index
    %42 = vector.load %arg5[%c0_29, %c0_30, %c1_31, %c0_32, %c0_33] : memref<1x1x4x8x128xf32, #tpu.memory_space<vmem>>, vector<1x1x1x8x128xf32>
    %43 = vector.shape_cast %42 : vector<1x1x1x8x128xf32> to vector<8x128xf32>
    %44 = arith.mulf %22, %9 : vector<8x128xf32>
    %45 = vector.shape_cast %44 : vector<8x128xf32> to vector<1x8x128xf32>
    %cst_34 = arith.constant dense<0.000000e+00> : vector<8x128xf32>
    %46 = vector.multi_reduction <add>, %45, %cst_34 [0] : vector<1x8x128xf32> to vector<8x128xf32>
    %47 = arith.addf %43, %46 : vector<8x128xf32>
    %c0_35 = arith.constant 0 : index
    %c0_36 = arith.constant 0 : index
    %c1_37 = arith.constant 1 : index
    %c0_38 = arith.constant 0 : index
    %c0_39 = arith.constant 0 : index
    %48 = vector.load %arg5[%c0_35, %c0_36, %c1_37, %c0_38, %c0_39] : memref<1x1x4x8x128xf32, #tpu.memory_space<vmem>>, vector<1x1x1x8x128xf32>
    %49 = vector.shape_cast %48 : vector<1x1x1x8x128xf32> to vector<8x128xf32>
    %50 = vector.shape_cast %47 : vector<8x128xf32> to vector<1x1x1x8x128xf32>
    tpu.vector_store %arg5[%c0_35, %c0_36, %c1_37, %c0_38, %c0_39], %50 {strides = array<i32>} : memref<1x1x4x8x128xf32, #tpu.memory_space<vmem>>, vector<1x1x1x8x128xf32>,
    %c0_40 = arith.constant 0 : index
    %c0_41 = arith.constant 0 : index
    %c2 = arith.constant 2 : index
    %c0_42 = arith.constant 0 : index
    %c0_43 = arith.constant 0 : index
    %51 = vector.load %arg5[%c0_40, %c0_41, %c2, %c0_42, %c0_43] : memref<1x1x4x8x128xf32, #tpu.memory_space<vmem>>, vector<1x1x1x8x128xf32>
    %52 = vector.shape_cast %51 : vector<1x1x1x8x128xf32> to vector<8x128xf32>
    %53 = vector.shape_cast %22 : vector<8x128xf32> to vector<1x8x128xf32>
    %cst_44 = arith.constant dense<0.000000e+00> : vector<8x128xf32>
    %54 = vector.multi_reduction <add>, %53, %cst_44 [0] : vector<1x8x128xf32> to vector<8x128xf32>
    %55 = arith.addf %52, %54 : vector<8x128xf32>
    %c0_45 = arith.constant 0 : index
    %c0_46 = arith.constant 0 : index
    %c2_47 = arith.constant 2 : index
    %c0_48 = arith.constant 0 : index
    %c0_49 = arith.constant 0 : index
    %56 = vector.load %arg5[%c0_45, %c0_46, %c2_47, %c0_48, %c0_49] : memref<1x1x4x8x128xf32, #tpu.memory_space<vmem>>, vector<1x1x1x8x128xf32>
    %57 = vector.shape_cast %56 : vector<1x1x1x8x128xf32> to vector<8x128xf32>
    %58 = vector.shape_cast %55 : vector<8x128xf32> to vector<1x1x1x8x128xf32>
    tpu.vector_store %arg5[%c0_45, %c0_46, %c2_47, %c0_48, %c0_49], %58 {strides = array<i32>} : memref<1x1x4x8x128xf32, #tpu.memory_space<vmem>>, vector<1x1x1x8x128xf32>,
    %c0_50 = arith.constant 0 : index
    %c0_51 = arith.constant 0 : index
    %c3 = arith.constant 3 : index
    %c0_52 = arith.constant 0 : index
    %c0_53 = arith.constant 0 : index
    %59 = vector.load %arg5[%c0_50, %c0_51, %c3, %c0_52, %c0_53] : memref<1x1x4x8x128xf32, #tpu.memory_space<vmem>>, vector<1x1x1x8x128xf32>
    %60 = vector.shape_cast %59 : vector<1x1x1x8x128xf32> to vector<8x128xf32>
    %61 = vector.shape_cast %9 : vector<8x128xf32> to vector<1x8x128xf32>
    %cst_54 = arith.constant dense<0.000000e+00> : vector<8x128xf32>
    %62 = vector.multi_reduction <add>, %61, %cst_54 [0] : vector<1x8x128xf32> to vector<8x128xf32>
    %63 = arith.addf %60, %62 : vector<8x128xf32>
    %c0_55 = arith.constant 0 : index
    %c0_56 = arith.constant 0 : index
    %c3_57 = arith.constant 3 : index
    %c0_58 = arith.constant 0 : index
    %c0_59 = arith.constant 0 : index
    %64 = vector.load %arg5[%c0_55, %c0_56, %c3_57, %c0_58, %c0_59] : memref<1x1x4x8x128xf32, #tpu.memory_space<vmem>>, vector<1x1x1x8x128xf32>
    %65 = vector.shape_cast %64 : vector<1x1x1x8x128xf32> to vector<8x128xf32>
    %66 = vector.shape_cast %63 : vector<8x128xf32> to vector<1x1x1x8x128xf32>
    tpu.vector_store %arg5[%c0_55, %c0_56, %c3_57, %c0_58, %c0_59], %66 {strides = array<i32>} : memref<1x1x4x8x128xf32, #tpu.memory_space<vmem>>, vector<1x1x1x8x128xf32>,
    return
  }
  func.func @transform_0(%arg0: i32, %arg1: i32, %arg2: i32) -> (i32, i32, i32, i32) {
    %c1_i32 = arith.constant 1 : i32
    %0 = arith.muli %arg1, %c1_i32 : i32
    %1 = arith.addi %0, %arg2 : i32
    %c0_i32 = arith.constant 0 : i32
    %c0_i32_0 = arith.constant 0 : i32
    %c0_i32_1 = arith.constant 0 : i32
    return %arg0, %c0_i32, %1, %c0_i32_0 : i32, i32, i32, i32
  }
  func.func @transform_1(%arg0: i32, %arg1: i32, %arg2: i32) -> (i32, i32, i32, i32) {
    %c1_i32 = arith.constant 1 : i32
    %0 = arith.muli %arg1, %c1_i32 : i32
    %1 = arith.addi %0, %arg2 : i32
    %c0_i32 = arith.constant 0 : i32
    %c0_i32_0 = arith.constant 0 : i32
    %c0_i32_1 = arith.constant 0 : i32
    return %arg0, %c0_i32, %1, %c0_i32_0 : i32, i32, i32, i32
  }
  func.func @transform_2(%arg0: i32, %arg1: i32, %arg2: i32) -> (i32, i32, i32, i32, i32) {
    %c0_i32 = arith.constant 0 : i32
    %c0_i32_0 = arith.constant 0 : i32
    %c0_i32_1 = arith.constant 0 : i32
    %c0_i32_2 = arith.constant 0 : i32
    return %arg0, %arg1, %c0_i32, %c0_i32_0, %c0_i32_1 : i32, i32, i32, i32, i32
  }
}

</mosaic_0001>

<llo_original>
// kernel: tpu_custom_call.1
$region0: #{tpu_custom_call.1}
  #allocation0 [shape = 'u32[]', space=smem, size = 0x4, offset = 0x4, fixed_abs, tag = 'smem constant byte address 0x4 - core index']
  #allocation1 [shape = 'u32[144,128]{1,0:T(1,128)}', space=vmem, size = 0x12000, scoped, tag = 'internal scratch']
  %s0 = inlined_call_operand.hbm [shape: f32[2,2,8,128], index: 0, kind: input, shape index: {}]
  %s1 = inlined_call_operand.hbm [shape: s8[2,1,8,128], index: 1, kind: input, shape index: {}]
  %s2 = inlined_call_operand.hbm [shape: f32[2,1,4,8,128], index: 2, kind: output, shape index: {}]
  %s3 = sld [smem:[#allocation0]]
  $region53: #{tpu_custom_call.1} parent=0
    _
  %s5 = ssub.s32 1, %s3
  %s6 = scalar_select 0, %s5, %s3
  $region1: #{tpu_custom_call.1} parent=0
    #allocation2 [shape = 'u8[16384]{0}', space=vmem, size = 0x4000, scoped, tag = 'input window, operand 0']
    #allocation3 [shape = 's32[2]{0}', space=sflag, size = 0x8, scoped, tag = 'scoped memory for tpu_custom_call.1']
    #allocation4 [shape = 's32[2]{0}', space=sflag, size = 0x8, scoped, tag = 'scoped memory for tpu_custom_call.1']
    #allocation5 [shape = 'u8[2048]{0}', space=vmem, size = 0x800, scoped, tag = 'input window, operand 1']
    #allocation6 [shape = 's32[2]{0}', space=sflag, size = 0x8, scoped, tag = 'scoped memory for tpu_custom_call.1']
    #allocation7 [shape = 'u8[32768]{0}', space=vmem, size = 0x8000, scoped, tag = 'output window, operand 0']
    %7 = vsyncpa [#allocation3], 0
    %s8 = scalar_lea.sflag [#allocation3], 1
    %9 = vsyncpa %s8, 0
    %10 = vsyncpa [#allocation6], 0
    %s11 = scalar_lea.sflag [#allocation6], 1
    %12 = vsyncpa %s11, 0
    %13 = vsyncpa [#allocation4], 0
    %s14 = scalar_lea.sflag [#allocation4], 1
    %15 = vsyncpa %s14, 0
    loop: start=0, step=1, limit=4
    $region2: #{tpu_custom_call.1} parent=1 // loop_pre_header
      _
    $region3: #{tpu_custom_call.1} parent=1 // loop_header
      %s17 = sphi 0, %s21
      %p18 = scmp.ge.s32.totalorder %s17, 4
      %s24 = sphi 0, %s43
      %s25 = sphi 0, %s39
      %s26 = sphi 0, %s35
      %s27 = sphi 0, %s24
      %s28 = sphi 0, %s25
      %s29 = sphi 0, %s26
      %s30 = sphi 0, %s27
      %s31 = sphi 0, %s28
      %s32 = sphi 0, %s29
      %s50 = sphi 0, %s52
      %s53 = sphi 0, %s50
      %s54 = sphi 0, %s53
      %s70 = sphi 0, %s54
      %s80 = sphi 0, %s82
      %s83 = sphi 0, %s80
      %s84 = sphi 0, %s83
      %s100 = sphi 0, %s84
      %s108 = sphi 0, %s110
      %s111 = sphi 0, %s108
      %s112 = sphi 0, %s111
      %s128 = sphi 0, %s112
    $region4: #{tpu_custom_call.1} parent=1 // loop_header_branch
      %20 = sbr.rel (%p18) target = $region8
    $region5: #{tpu_custom_call.1} parent=1 // loop_body
      %s22 = ssub.s32 %s17, 1
      %s23 = ssub.s32 %s17, 2
      %s33 = sadd.s32 1, %s26
      %p34 = scmp.ge.s32.totalorder %s33, 1
      %s35 = scalar_select %p34, 0, %s33
      %s36 = sadd.s32 1, %s25
      %s37 = scalar_select %p34, %s36, %s25
      %p38 = scmp.ge.s32.totalorder %s37, 1
      %s39 = scalar_select %p38, 0, %s37
      %s40 = sadd.s32 1, %s24
      %s41 = scalar_select %p38, %s40, %s24
      %p42 = scmp.ge.s32.totalorder %s41, 2
      %s43 = scalar_select %p42, 0, %s41
      %s44 = sadd.s32 %s25, %s26
      %s45 = sadd.s32 %s39, %s35
      %s46 = ssub.s32 %s24, %s43
      %s47 = ssub.s32 %s44, %s45
      %s48 = sor.u32 %s46, %s47
      %p49 = scmp.eq.s32.totalorder %s48, 0
      %s51 = sadd.s32 %s50, 1
      %s52 = scalar_select %p49, %s50, %s51
      %p55 = pneg %p49
      %p56 = scmp.eq.s32.totalorder %s17, 1
      %p57 = por %p55, %p56
      %p58 = scmp.ne.s32.totalorder %s50, %s53
      %p59 = scmp.eq.s32.totalorder %s17, 0
      %p60 = por %p58, %p59
      %p61 = scmp.ne.s32.totalorder %s50, %s53
      %p62 = scmp.eq.s32.totalorder %s22, 1
      %p63 = por %p61, %p62
      %p64 = scmp.ne.s32.totalorder %s53, %s54
      %p65 = scmp.eq.s32.totalorder %s22, 0
      %p66 = por %p64, %p65
      %p67 = scmp.ne.s32.totalorder %s53, %s54
      %p68 = scmp.eq.s32.totalorder %s23, 1
      %p69 = por %p67, %p68
      %p71 = scmp.ne.s32.totalorder %s54, %s70
      %p72 = scmp.eq.s32.totalorder %s23, 0
      %p73 = por %p71, %p72
      %s74 = sadd.s32 %s25, %s26
      %s75 = sadd.s32 %s39, %s35
      %s76 = ssub.s32 %s24, %s43
      %s77 = ssub.s32 %s74, %s75
      %s78 = sor.u32 %s76, %s77
      %p79 = scmp.eq.s32.totalorder %s78, 0
      %s81 = sadd.s32 %s80, 1
      %s82 = scalar_select %p79, %s80, %s81
      %p85 = pneg %p79
      %p86 = scmp.eq.s32.totalorder %s17, 1
      %p87 = por %p85, %p86
      %p88 = scmp.ne.s32.totalorder %s80, %s83
      %p89 = scmp.eq.s32.totalorder %s17, 0
      %p90 = por %p88, %p89
      %p91 = scmp.ne.s32.totalorder %s80, %s83
      %p92 = scmp.eq.s32.totalorder %s22, 1
      %p93 = por %p91, %p92
      %p94 = scmp.ne.s32.totalorder %s83, %s84
      %p95 = scmp.eq.s32.totalorder %s22, 0
      %p96 = por %p94, %p95
      %p97 = scmp.ne.s32.totalorder %s83, %s84
      %p98 = scmp.eq.s32.totalorder %s23, 1
      %p99 = por %p97, %p98
      %p101 = scmp.ne.s32.totalorder %s84, %s100
      %p102 = scmp.eq.s32.totalorder %s23, 0
      %p103 = por %p101, %p102
      %s104 = ssub.s32 %s24, %s43
      %s105 = ssub.s32 %s25, %s39
      %s106 = sor.u32 %s104, %s105
      %p107 = scmp.eq.s32.totalorder %s106, 0
      %s109 = sadd.s32 %s108, 1
      %s110 = scalar_select %p107, %s108, %s109
      %p113 = pneg %p107
      %p114 = scmp.eq.s32.totalorder %s17, 1
      %p115 = por %p113, %p114
      %p116 = scmp.ne.s32.totalorder %s108, %s111
      %p117 = scmp.eq.s32.totalorder %s17, 0
      %p118 = por %p116, %p117
      %p119 = scmp.ne.s32.totalorder %s108, %s111
      %p120 = scmp.eq.s32.totalorder %s22, 1
      %p121 = por %p119, %p120
      %p122 = scmp.ne.s32.totalorder %s111, %s112
      %p123 = scmp.eq.s32.totalorder %s22, 0
      %p124 = por %p122, %p123
      %p125 = scmp.ne.s32.totalorder %s111, %s112
      %p126 = scmp.eq.s32.totalorder %s23, 1
      %p127 = por %p125, %p126
      %p129 = scmp.ne.s32.totalorder %s112, %s128
      %p130 = scmp.eq.s32.totalorder %s23, 0
      %p131 = por %p129, %p130
      %p132 = scmp.le.s32.totalorder 1, %s17
      %p133 = scmp.lt.s32.totalorder %s17, 3
      %p134 = pnand %p132, %p133
      %p135 = pneg %p134
      // Predicated region
      $region9: #{tpu_custom_call.1} parent=5 // pred_check
        _
      $region10: #{tpu_custom_call.1} parent=5 // pred_check_branch
        %137 = sbr.rel (%p134) target = $region12
      $region11: #{tpu_custom_call.1} parent=5 // pred_region
        %s138 = ssub.s32 %s17, 1
      $region12: #{tpu_custom_call.1} parent=5 // pred_fallthru
        _
      %p139 = scmp.lt.s32.totalorder %s17, 2
      // Predicated region
      $region13: #{tpu_custom_call.1} parent=5 // pred_check
        %p140 = pneg %p139
      $region14: #{tpu_custom_call.1} parent=5 // pred_check_branch
        %142 = sbr.rel (%p140) target = $region16
      $region15: #{tpu_custom_call.1} parent=5 // pred_region
        // Predicated region
        $region17: #{tpu_custom_call.1} parent=15 // pred_check
          %p143 = pneg %p60
        $region18: #{tpu_custom_call.1} parent=15 // pred_check_branch
          %145 = sbr.rel (%p143) target = $region20
        $region19: #{tpu_custom_call.1} parent=15 // pred_region
          %s146 = sand.u32 %s50, 1
          %s147 = scalar_lea.sflag [#allocation3], %s146
          %s148 = sand.u32 %s50, 1
          %s149 = smul.addr %s148, 16
          %s150 = scalar_lea.vmem [#allocation2], %s149
          %s151 = sadd.s32 %s25, %s26
          %s153 = ssub.s32 256, 256
          %154 = vsyncadd %s147, %s153
          %s155 = smul.addr %s24, 2
          %s156 = sadd.s32 %s151, %s155
          %s157 = smul.addr %s156, 128
          %s158 = scalar_lea.hbm %s0, %s157
          %s159 = sshll.u32 %s150, 4
          %s160 = int_to_ptr.vmem [resolvable:$true] %s159
          %165 = dma.hbm_to_vmem [thread:$0]  %s158, 256, %s160, %s147, 128, 128, 8
        $region20: #{tpu_custom_call.1} parent=15 // pred_fallthru
          _
        // Predicated region
        $region21: #{tpu_custom_call.1} parent=15 // pred_check
          %p166 = pneg %p90
        $region22: #{tpu_custom_call.1} parent=15 // pred_check_branch
          %168 = sbr.rel (%p166) target = $region24
        $region23: #{tpu_custom_call.1} parent=15 // pred_region
          %s169 = sand.u32 %s80, 1
          %s170 = scalar_lea.sflag [#allocation6], %s169
          %s171 = sand.u32 %s80, 1
          %s172 = smul.addr %s171, 2
          %s173 = scalar_lea.vmem [#allocation5], %s172
          %s174 = sadd.s32 %s25, %s26
          %s176 = ssub.s32 32, 32
          %177 = vsyncadd %s170, %s176
          %s178 = sadd.s32 %s174, %s24
          %s179 = smul.addr %s178, 32
          %s180 = scalar_lea.hbm %s1, %s179
          %s182 = sshll.u32 %s173, 4
          %s183 = int_to_ptr.vmem [resolvable:$true] %s182
          %185 = dma.hbm_to_vmem [thread:$0]  %s180, 32, %s183, %s170
        $region24: #{tpu_custom_call.1} parent=15 // pred_fallthru
          _
      $region16: #{tpu_custom_call.1} parent=5 // pred_fallthru
        _
      %p186 = scmp.le.s32.totalorder 1, %s17
      %p187 = scmp.lt.s32.totalorder %s17, 3
      %p188 = pnand %p186, %p187
      %p189 = pneg %p188
      // Predicated region
      $region25: #{tpu_custom_call.1} parent=5 // pred_check
        _
      $region26: #{tpu_custom_call.1} parent=5 // pred_check_branch
        %191 = sbr.rel (%p188) target = $region28
      $region27: #{tpu_custom_call.1} parent=5 // pred_region
        %s192 = ssub.s32 %s17, 1
        %s193 = sand.u32 %s53, 1
        %s194 = scalar_lea.sflag [#allocation3], %s193
        %s195 = sand.u32 %s53, 1
        %s196 = smul.addr %s195, 16
        %s197 = scalar_lea.vmem [#allocation2], %s196
        // Predicated region
        $region29: #{tpu_custom_call.1} parent=27 // pred_check
          %p198 = pneg %p66
        $region30: #{tpu_custom_call.1} parent=27 // pred_check_branch
          %200 = sbr.rel (%p198) target = $region32
        $region31: #{tpu_custom_call.1} parent=27 // pred_region
          %201 = dma.done %s194, 256
        $region32: #{tpu_custom_call.1} parent=27 // pred_fallthru
          _
        %s202 = sand.u32 %s83, 1
        %s203 = scalar_lea.sflag [#allocation6], %s202
        %s204 = sand.u32 %s83, 1
        %s205 = smul.addr %s204, 2
        %s206 = scalar_lea.vmem [#allocation5], %s205
        // Predicated region
        $region33: #{tpu_custom_call.1} parent=27 // pred_check
          %p207 = pneg %p96
        $region34: #{tpu_custom_call.1} parent=27 // pred_check_branch
          %209 = sbr.rel (%p207) target = $region36
        $region35: #{tpu_custom_call.1} parent=27 // pred_region
          %210 = dma.done %s203, 32
        $region36: #{tpu_custom_call.1} parent=27 // pred_fallthru
          _
        %s211 = sand.u32 %s53, 1
        %s212 = scalar_lea.sflag [#allocation3], %s211
        %s213 = sand.u32 %s53, 1
        %s214 = smul.addr %s213, 16
        %s215 = scalar_lea.vmem [#allocation2], %s214
        %p216 = pneg %p66
        %p217 = pneg %p63
        %s218 = sand.u32 %s83, 1
        %s219 = scalar_lea.sflag [#allocation6], %s218
        %s220 = sand.u32 %s83, 1
        %s221 = smul.addr %s220, 2
        %s222 = scalar_lea.vmem [#allocation5], %s221
        %p223 = pneg %p96
        %p224 = pneg %p93
        %p225 = pneg %p124
        %p226 = pneg %p121
        %s227 = sand.u32 %s111, 1
        %s228 = scalar_lea.sflag [#allocation4], %s227
        %s229 = sand.u32 %s111, 1
        %s230 = smul.addr %s229, 32
        %s231 = scalar_lea.vmem [#allocation7], %s230
        %s232 = sadd.s32 %s28, %s29
        %s233 = sadd.s32 %s28, %s29
        %p234 = scmp.eq.s32.totalorder %s29, 0
        // Predicated region
        $region37: #{tpu_custom_call.1} parent=27 // pred_check
          %p235 = pneg %p234
        $region38: #{tpu_custom_call.1} parent=27 // pred_check_branch
          %237 = sbr.rel (%p235) target = $region40
        $region39: #{tpu_custom_call.1} parent=27 // pred_region
          %238 = vst [vmem:[%s231] sm:$0xff] 0.0
          %239 = vst [vmem:[%s231 + $0x8] sm:$0xff] 0.0
          %240 = vst [vmem:[%s231 + $0x10] sm:$0xff] 0.0
          %241 = vst [vmem:[%s231 + $0x18] sm:$0xff] 0.0
        $region40: #{tpu_custom_call.1} parent=27 // pred_fallthru
          _
        %v242 = vld [vmem:[%s197] sm:$0xff]
        %s243 = scalar_lea.vmem %s197, 8 [#allocation2]
        %v244 = vld [vmem:[%s243] sm:$0xff]
        %v245 = vld [vmem:[%s206] sm:$0x3]
        %v246 = vunpack.c.0.s8 %v245
        %v247 = vcvt.s32.f32 %v246
        %v248 = vsub.f32 %v244, %v242
        %v249 = vand.u32 2147483647, %v248
        %v250 = vsub.f32 0.0, %v249
        %v251 = vmul.f32 %v250, 1.442695
        %v252 = vpow.pop %v251
        %vm253 = vcmp.ge.f32.partialorder %v248, 0.0
        %v254 = vsel %vm253, 1.0, %v252
        %v255 = vadd.f32 %v252, 1.0
        %v256 = vrcp.pop %v255
        %v257 = vmul.f32 %v254, %v256
        %v258 = vmul.f32 %v247, 2.0
        %v259 = vsub.f32 1.0, %v258
        %v260 = vmul.f32 %v248, %v259
        %v261 = vmax.f32 %v260, 0.0
        %v262 = vlog2.pop %v255
        %v263 = vmul.f32 %v262, 0.6931472
        %v264 = vadd.f32 %v261, %v263
        %v265 = vld [vmem:[%s231] sm:$0xff]
        %v266 = vadd.f32 %v264, 0.0
        %v267 = vadd.f32 %v265, %v266
        %268 = vst [vmem:[%s231] sm:$0xff] %v267
        %s269 = scalar_lea.vmem %s231, 8 [#allocation7]
        %v270 = vld [vmem:[%s269] sm:$0xff]
        %v271 = vmul.f32 %v257, %v247
        %v272 = vadd.f32 %v271, 0.0
        %v273 = vadd.f32 %v270, %v272
        %274 = vst [vmem:[%s269] sm:$0xff] %v273
        %s275 = scalar_lea.vmem %s231, 16 [#allocation7]
        %v276 = vld [vmem:[%s275] sm:$0xff]
        %v277 = vadd.f32 %v257, 0.0
        %v278 = vadd.f32 %v276, %v277
        %279 = vst [vmem:[%s275] sm:$0xff] %v278
        %s280 = scalar_lea.vmem %s231, 24 [#allocation7]
        %v281 = vld [vmem:[%s280] sm:$0xff]
        %v282 = vadd.f32 %v247, 0.0
        %v283 = vadd.f32 %v281, %v282
        %284 = vst [vmem:[%s280] sm:$0xff] %v283
        %s285 = sand.u32 %s111, 1
        %s286 = scalar_lea.sflag [#allocation4], %s285
        %s287 = sand.u32 %s111, 1
        %s288 = smul.addr %s287, 32
        %s289 = scalar_lea.vmem [#allocation7], %s288
        // Predicated region
        $region41: #{tpu_custom_call.1} parent=27 // pred_check
          %p290 = pneg %p121
        $region42: #{tpu_custom_call.1} parent=27 // pred_check_branch
          %292 = sbr.rel (%p290) target = $region44
        $region43: #{tpu_custom_call.1} parent=27 // pred_region
          %s294 = ssub.s32 512, 512
          %295 = vsyncadd %s286, %s294
          %s296 = smul.addr %s28, 4
          %s297 = smul.addr %s27, 4
          %s298 = sadd.s32 %s296, %s297
          %s299 = smul.addr %s298, 128
          %s300 = scalar_lea.hbm %s2, %s299
          %s301 = sshll.u32 %s289, 4
          %s302 = int_to_ptr.vmem [resolvable:$true] %s301
          %307 = dma.vmem_to_hbm [thread:$0]  %s302, 512, %s300, %s286, 128, 128, 8
        $region44: #{tpu_custom_call.1} parent=27 // pred_fallthru
          _
      $region28: #{tpu_custom_call.1} parent=5 // pred_fallthru
        _
      %p308 = scmp.le.s32.totalorder 2, %s17
      // Predicated region
      $region45: #{tpu_custom_call.1} parent=5 // pred_check
        %p309 = pneg %p308
      $region46: #{tpu_custom_call.1} parent=5 // pred_check_branch
        %311 = sbr.rel (%p309) target = $region48
      $region47: #{tpu_custom_call.1} parent=5 // pred_region
        %s312 = ssub.s32 %s17, 2
        // Predicated region
        $region49: #{tpu_custom_call.1} parent=47 // pred_check
          %p313 = pneg %p127
        $region50: #{tpu_custom_call.1} parent=47 // pred_check_branch
          %315 = sbr.rel (%p313) target = $region52
        $region51: #{tpu_custom_call.1} parent=47 // pred_region
          %s316 = sand.u32 %s112, 1
          %s317 = scalar_lea.sflag [#allocation4], %s316
          %s318 = sand.u32 %s112, 1
          %s319 = smul.addr %s318, 32
          %s320 = scalar_lea.vmem [#allocation7], %s319
          %321 = dma.done %s317, 512
        $region52: #{tpu_custom_call.1} parent=47 // pred_fallthru
          _
      $region48: #{tpu_custom_call.1} parent=5 // pred_fallthru
        _
    $region6: #{tpu_custom_call.1} parent=1 // loop_footer
      %s21 = sadd.s32 1, %s17
    $region7: #{tpu_custom_call.1} parent=1 // loop_footer_branch
      %16 = sbr.rel target = $region3
    $region8: #{tpu_custom_call.1} parent=1 // loop_exit
      _
    %322 = vsyncpa [#allocation3], 1
    %s323 = scalar_lea.sflag [#allocation3], 1
    %324 = vsyncpa %s323, 1
    %325 = vsyncpa [#allocation6], 1
    %s326 = scalar_lea.sflag [#allocation6], 1
    %327 = vsyncpa %s326, 1
    %328 = vsyncpa [#allocation4], 1
    %s329 = scalar_lea.sflag [#allocation4], 1
    %330 = vsyncpa %s329, 1

</llo_original>
